<compile_context>
chip_gen: v6e
topology: v6e:2x2x1
jax: 0.10.0
libtpu: 0.0.40
codegen_flags: <defaults>
</compile_context>

<pallas_src>
import jax
import jax.numpy as jnp
from jax import lax
from jax.experimental import pallas as pl
from jax.experimental.pallas import tpu as pltpu


# ----------------------------- Pallas kernel --------------------------------

def lstm_seq_kernel(z_ref, keep_ref, h0_ref, c0_ref, wh_hbm,
                    h_seq_ref, h_fin_ref, c_fin_ref,
                    wh_vmem, h_sc, c_sc, wh_sem):
    """Recurrent LSTM over one chunk of TC timesteps.

    z_ref:    [TC, B, 4H] precomputed x @ Wx + b (stream dtype)
    keep_ref: [TC, B, 1]  1 - reset (f32)
    h0_ref/c0_ref: [B, H] initial state (f32)
    wh_hbm:   [H, 4H]     recurrent weights, raw HBM ref (memory_space=ANY)
    h_seq_ref:[TC, B, H]  per-step hidden output
    h_fin_ref/c_fin_ref: [B, H] final state (written on last chunk only)
    wh_vmem:  [H, 4H]     VMEM-resident single-buffered copy of Wh
    h_sc/c_sc:[B, H]      f32 recurrent carry across chunks
    wh_sem:   DMA semaphore for the one-time Wh load
    """
    @pl.when(pl.program_id(0) == 0)
    def _init():
        # One-time: DMA recurrent weights into VMEM (single-buffered, resident
        # for the whole grid) and seed the recurrent carry from h0/c0.
        wh_load = pltpu.make_async_copy(wh_hbm, wh_vmem, wh_sem)
        wh_load.start()
        h_sc[...] = h0_ref[...]
        c_sc[...] = c0_ref[...]
        wh_load.wait()

    tc = z_ref.shape[0]              # timesteps in this chunk (static)
    hdim = h_sc.shape[-1]
    wh = wh_vmem[...]                # [H, 4H], matmul dtype
    mm_dtype = wh.dtype

    def step(t, carry):
        h, c = carry                                   # [B, H] f32
        keep = keep_ref[t]                             # [B, 1]
        h = h * keep                                   # state reset
        c = c * keep
        # Fused recurrent matmul: one [B, H] x [H, 4H] MXU push per step;
        # the x-projection and bias are already folded into z.
        gates = z_ref[t].astype(jnp.float32) + jnp.dot(
            h.astype(mm_dtype), wh, preferred_element_type=jnp.float32)
        i_g = gates[:, 0 * hdim:1 * hdim]              # torch.split order
        g_g = gates[:, 1 * hdim:2 * hdim]
        f_g = gates[:, 2 * hdim:3 * hdim]
        o_g = gates[:, 3 * hdim:4 * hdim]
        f = jax.nn.sigmoid(f_g + 1.0)
        c_new = f * c + jax.nn.sigmoid(i_g) * jnp.tanh(g_g)
        h_new = jax.nn.sigmoid(o_g) * jnp.tanh(c_new)
        h_seq_ref[t] = h_new.astype(h_seq_ref.dtype)
        return h_new, c_new

    h, c = lax.fori_loop(0, tc, step, (h_sc[...], c_sc[...]), unroll=True)

    # Carry the recurrent state to the next chunk.
    h_sc[...] = h
    c_sc[...] = c

    # Final state is written (and DMA'd back into the aliased h0/c0 buffers)
    # only on the last chunk -- no per-step vector stores for it.
    @pl.when(pl.program_id(0) == pl.num_programs(0) - 1)
    def _finalize():
        h_fin_ref[...] = h
        c_fin_ref[...] = c


# ----------------------------- parameter prep -------------------------------

def prepare_lstm_params(weight, bias, input_dim, hidden_size,
                        matmul_dtype=jnp.bfloat16):
    """One-time preprocessing of the nn.Linear parameters.

    weight: [4H, D+H] (PyTorch nn.Linear layout), bias: [4H]
    returns (Wx [D, 4H], Wh [H, 4H], b [1, 4H]); gate order along the 4H axis
    is i, g, f, o, matching torch.split.

    Note: with matmul_dtype=bf16 the recurrent h is re-cast to bf16 every
    step, so rounding compounds over long sequences; use f32 if that matters.
    """
    D, H = input_dim, hidden_size
    wx = weight[:, :D].T                                 # [D, 4H]
    wh = weight[:, D:].T                                 # [H, 4H]
    b = bias.reshape(1, 4 * H).astype(jnp.float32)       # [1, 4H]
    return wx.astype(matmul_dtype), wh.astype(matmul_dtype), b


def _pick_time_chunk(T, max_chunk):
    tc = max(1, min(int(max_chunk), T))
    while T % tc:
        tc -= 1
    return tc


# ----------------------------- forward wrappers ------------------------------

def lstm_sequence_forward(xs, state, resets, params, hidden_size, *,
                          time_chunk=8):
    """Runs the LSTM cell over a sequence with a single recurrent pallas_call.

    xs:     [T, B, D]
    state:  (h, c) each [1, B, H]
    resets: [T, B]
    params: output of prepare_lstm_params
    returns (h_seq [T, B, H], (h_final [1, B, H], c_final [1, B, H]))
    """
    wx, wh, b = params
    T, B, D = xs.shape
    H = hidden_size
    mm_dtype = wh.dtype

    # Hoisted input projection: one large, fully parallel matmul over all T
    # (off the serial critical path; on v7x XLA can use both TensorCores).
    z = jnp.dot(xs.reshape(T * B, D).astype(mm_dtype), wx,
                preferred_element_type=jnp.float32) + b        # [T*B, 4H] f32
    z = z.reshape(T, B, 4 * H).astype(mm_dtype)                # stream dtype

    keep = (1.0 - resets.astype(jnp.float32))[:, :, None]      # [T, B, 1]
    h0 = state[0][0].astype(jnp.float32)                       # [B, H]
    c0 = state[1][0].astype(jnp.float32)                       # [B, H]

    tc = _pick_time_chunk(T, time_chunk)
    n_chunks = T // tc

    # Rough resident-VMEM estimate; raise the scoped limit only when the
    # resident-weight plan needs it (never above v7x's 64 MiB physical VMEM --
    # beyond that the column-tiling fallback in the TODO is required).
    itm = jnp.dtype(mm_dtype).itemsize
    est_bytes = (H * 4 * H * itm                                  # resident Wh
                 + 2 * tc * B * 4 * H * itm                       # z stream
                 + 2 * tc * B * 4                                 # keep stream
                 + 2 * tc * B * H * jnp.dtype(xs.dtype).itemsize  # h_seq out
                 + 8 * B * H * 4)                                 # state blocks
    vmem_limit = None
    if est_bytes > 24 * 1024 * 1024:
        vmem_limit = min(int(est_bytes * 1.5), 64 * 1024 * 1024)

    const2 = lambda t: (0, 0)

    h_seq, h_fin, c_fin = pl.pallas_call(
        lstm_seq_kernel,
        out_shape=(jax.ShapeDtypeStruct((T, B, H), xs.dtype),
                   jax.ShapeDtypeStruct((B, H), jnp.float32),
                   jax.ShapeDtypeStruct((B, H), jnp.float32)),
        grid_spec=pltpu.PrefetchScalarGridSpec(
            num_scalar_prefetch=0,
            grid=(n_chunks,),
            in_specs=[
                pl.BlockSpec((tc, B, 4 * H), lambda t: (t, 0, 0)),  # z chunk
                pl.BlockSpec((tc, B, 1), lambda t: (t, 0, 0)),      # keep chunk
                pl.BlockSpec((B, H), const2),                       # h0
                pl.BlockSpec((B, H), const2),                       # c0
                pl.BlockSpec(memory_space=pl.ANY),                  # Wh (HBM)
            ],
            out_specs=(
                pl.BlockSpec((tc, B, H), lambda t: (t, 0, 0)),      # h per chunk
                pl.BlockSpec((B, H), const2),                       # final h
                pl.BlockSpec((B, H), const2),                       # final c
            ),
            scratch_shapes=[
                pltpu.VMEM((H, 4 * H), mm_dtype),   # resident Wh (1 copy)
                pltpu.VMEM((B, H), jnp.float32),    # h carry
                pltpu.VMEM((B, H), jnp.float32),    # c carry
                pltpu.SemaphoreType.DMA(()),        # Wh load semaphore
            ],
        ),
        compiler_params=pltpu.CompilerParams(
            dimension_semantics=("arbitrary",),     # recurrent (serial) axis
            vmem_limit_bytes=vmem_limit),
        input_output_aliases={2: 1, 3: 2},          # h0->h_fin, c0->c_fin
    )(z, keep, h0, c0, wh)

    new_state = (h_fin[None].astype(state[0].dtype),
                 c_fin[None].astype(state[1].dtype))
    return h_seq, new_state


def lstm_forward(x, state, reset, params, hidden_size):
    """Single-step API mirroring LSTM.forward(x, state, reset) (T == 1)."""
    h_seq, new_state = lstm_sequence_forward(x[None], state, reset[None],
                                             params, hidden_size)
    return h_seq[0], new_state


# ----------------------------- pure-JAX reference ---------------------------

def lstm_cell_reference(x, state, reset, weight, bias, hidden_size):
    keep = (1.0 - reset)[..., None]
    h = state[0] * keep
    c = state[1] * keep
    xh = jnp.concatenate([x, h[0]], axis=-1)
    gated = xh @ weight.T + bias
    H = hidden_size
    i, g, f, o = (gated[:, 0:H], gated[:, H:2 * H],
                  gated[:, 2 * H:3 * H], gated[:, 3 * H:4 * H])
    f = jax.nn.sigmoid(f + 1.0)
    c_new = f * c[0] + jax.nn.sigmoid(i) * jnp.tanh(g)
    h_new = jax.nn.sigmoid(o) * jnp.tanh(c_new)
    return h_new, (h_new[None], c_new[None])


def lstm_sequence_reference(xs, state, resets, weight, bias, hidden_size):
    hs = []
    for t in range(xs.shape[0]):
        h, state = lstm_cell_reference(xs[t], state, resets[t],
                                       weight, bias, hidden_size)
        hs.append(h)
    return jnp.stack(hs), state


if __name__ == "__main__":
    T, B, D, H = 8, 2, 4, 32
    key = jax.random.PRNGKey(0)
    kx, kh, kc, kr, kw, kb = jax.random.split(key, 6)

    xs = jax.random.normal(kx, (T, B, D), dtype=jnp.float32)
    h0 = jax.random.normal(kh, (1, B, H), dtype=jnp.float32)
    c0 = jax.random.normal(kc, (1, B, H), dtype=jnp.float32)
    resets = (jax.random.uniform(kr, (T, B)) > 0.7).astype(jnp.float32)

    # Deterministic parameter init (nn.Linear(input_dim + hidden, 4 * hidden))
    fan_in = D + H
    bound = float(1.0 / (fan_in ** 0.5))
    weight = jax.random.uniform(kw, (4 * H, D + H), minval=-bound, maxval=bound,
                                dtype=jnp.float32)
    bias = jax.random.uniform(kb, (4 * H,), minval=-bound, maxval=bound,
                              dtype=jnp.float32)

    # References (pure JAX, exactly the torch module looped over T).
    h_seq_r, (h_fin_r, c_fin_r) = lstm_sequence_reference(
        xs, (h0, c0), resets, weight, bias, H)
    h1_r, (h1_sr, c1_sr) = lstm_cell_reference(
        xs[0], (h0, c0), resets[0], weight, bias, H)

    # Exact-precision path (f32 matmuls), chunked grid (T=8, TC=4 -> 2 steps).
    params_f32 = prepare_lstm_params(weight, bias, D, H,
                                     matmul_dtype=jnp.float32)
    h_seq, (h_n, c_n) = lstm_sequence_forward(xs, (h0, c0), resets,
                                              params_f32, H, time_chunk=4)
    jax.block_until_ready((h_seq, h_n, c_n))
    assert h_seq.shape == (T, B, H)
    assert h_n.shape == (1, B, H) and c_n.shape == (1, B, H)
    assert jnp.allclose(h_seq, h_seq_r, atol=1e-5, rtol=1e-5)
    assert jnp.allclose(h_n, h_fin_r, atol=1e-5, rtol=1e-5)
    assert jnp.allclose(c_n, c_fin_r, atol=1e-5, rtol=1e-5)

    # Single-step module API (T == 1).
    h1, (h1_st, c1_st) = lstm_forward(xs[0], (h0, c0), resets[0], params_f32, H)
    jax.block_until_ready((h1, h1_st, c1_st))
    assert jnp.allclose(h1, h1_r, atol=1e-5, rtol=1e-5)
    assert jnp.allclose(h1_st, h1_sr, atol=1e-5, rtol=1e-5)
    assert jnp.allclose(c1_st, c1_sr, atol=1e-5, rtol=1e-5)

    # Performance path: bf16 matmul operands / bf16 streamed Z, f32 gate math
    # and cell state; whole sequence in a single grid step.
    params_bf16 = prepare_lstm_params(weight, bias, D, H,
                                      matmul_dtype=jnp.bfloat16)
    h_seq_bf, (h_n_bf, c_n_bf) = lstm_sequence_forward(
        xs, (h0, c0), resets, params_bf16, H, time_chunk=8)
    jax.block_until_ready((h_seq_bf, h_n_bf, c_n_bf))
    assert jnp.allclose(h_seq_bf, h_seq_r, atol=5e-2, rtol=5e-2)
    assert jnp.allclose(c_n_bf, c_fin_r, atol=5e-2, rtol=5e-2)

    print("KERNEL_OK")
</pallas_src>

<mosaic_0001>
module attributes {stable_mosaic.version = 11 : i64} {
  func.func @lstm_seq_kernel(%arg0: i32, %arg1: memref<4x2x128xf32, #tpu.memory_space<vmem>>, %arg2: memref<4x2x1xf32, #tpu.memory_space<vmem>>, %arg3: memref<2x32xf32, #tpu.memory_space<vmem>>, %arg4: memref<2x32xf32, #tpu.memory_space<vmem>>, %arg5: memref<32x128xf32, #tpu.memory_space<any>>, %arg6: memref<4x2x32xf32, #tpu.memory_space<vmem>>, %arg7: memref<2x32xf32, #tpu.memory_space<vmem>>, %arg8: memref<2x32xf32, #tpu.memory_space<vmem>>, %arg9: memref<32x128xf32, #tpu.memory_space<vmem>>, %arg10: memref<2x32xf32, #tpu.memory_space<vmem>>, %arg11: memref<2x32xf32, #tpu.memory_space<vmem>>, %arg12: memref<!tpu.dma_semaphore, #tpu.memory_space<semaphore_mem>>) attributes {dimension_semantics = [#tpu.dimension_semantics<arbitrary>], iteration_bounds = array<i64: 2>, scalar_prefetch = 0 : i64, scratch_operands = 4 : i64, tpu.core_type = #tpu.core_type<tc>, window_params = [{transform_indices = @transform_0, window_bounds = array<i64: 4, 2, 128>}, {transform_indices = @transform_1, window_bounds = array<i64: 4, 2, 1>}, {pipeline_mode = #tpu.pipeline_mode<synchronous>, transform_indices = @transform_2, window_bounds = array<i64: 2, 32>}, {pipeline_mode = #tpu.pipeline_mode<synchronous>, transform_indices = @transform_3, window_bounds = array<i64: 2, 32>}, {}, {transform_indices = @transform_5, window_bounds = array<i64: 4, 2, 32>}, {pipeline_mode = #tpu.pipeline_mode<synchronous>, transform_indices = @transform_6, window_bounds = array<i64: 2, 32>}, {pipeline_mode = #tpu.pipeline_mode<synchronous>, transform_indices = @transform_7, window_bounds = array<i64: 2, 32>}]} {
    %c0_i32 = arith.constant 0 : i32
    %0 = arith.cmpi eq, %arg0, %c0_i32 : i32
    %1 = arith.extui %0 : i1 to i32
    %c0_i32_0 = arith.constant 0 : i32
    %2 = arith.cmpi ne, %1, %c0_i32_0 : i32
    scf.if %2 {
      tpu.enqueue_dma source(%arg5 : memref<32x128xf32, #tpu.memory_space<any>>) target(%arg9 : memref<32x128xf32, #tpu.memory_space<vmem>>) target_semaphore(%arg12 : memref<!tpu.dma_semaphore, #tpu.memory_space<semaphore_mem>>)
      %c0_56 = arith.constant 0 : index
      %c0_57 = arith.constant 0 : index
      %183 = vector.load %arg3[%c0_56, %c0_57] : memref<2x32xf32, #tpu.memory_space<vmem>>, vector<2x32xf32>
      %c0_58 = arith.constant 0 : index
      %c0_59 = arith.constant 0 : index
      %184 = vector.load %arg10[%c0_58, %c0_59] : memref<2x32xf32, #tpu.memory_space<vmem>>, vector<2x32xf32>
      tpu.vector_store %arg10[%c0_58, %c0_59], %183 {strides = array<i32>} : memref<2x32xf32, #tpu.memory_space<vmem>>, vector<2x32xf32>,
      %c0_60 = arith.constant 0 : index
      %c0_61 = arith.constant 0 : index
      %185 = vector.load %arg4[%c0_60, %c0_61] : memref<2x32xf32, #tpu.memory_space<vmem>>, vector<2x32xf32>
      %c0_62 = arith.constant 0 : index
      %c0_63 = arith.constant 0 : index
      %186 = vector.load %arg11[%c0_62, %c0_63] : memref<2x32xf32, #tpu.memory_space<vmem>>, vector<2x32xf32>
      tpu.vector_store %arg11[%c0_62, %c0_63], %185 {strides = array<i32>} : memref<2x32xf32, #tpu.memory_space<vmem>>, vector<2x32xf32>,
      tpu.wait_dma2 semaphore(%arg12 : memref<!tpu.dma_semaphore, #tpu.memory_space<semaphore_mem>>) src(%arg5 : memref<32x128xf32, #tpu.memory_space<any>>) dst(%arg9 : memref<32x128xf32, #tpu.memory_space<vmem>>)
    } else {
    }
    %c0 = arith.constant 0 : index
    %c0_1 = arith.constant 0 : index
    %3 = vector.load %arg9[%c0, %c0_1] : memref<32x128xf32, #tpu.memory_space<vmem>>, vector<32x128xf32>
    %c0_2 = arith.constant 0 : index
    %c0_3 = arith.constant 0 : index
    %4 = vector.load %arg10[%c0_2, %c0_3] : memref<2x32xf32, #tpu.memory_space<vmem>>, vector<2x32xf32>
    %c0_4 = arith.constant 0 : index
    %c0_5 = arith.constant 0 : index
    %5 = vector.load %arg11[%c0_4, %c0_5] : memref<2x32xf32, #tpu.memory_space<vmem>>, vector<2x32xf32>
    %c0_i32_6 = arith.constant 0 : i32
    %6 = arith.index_cast %c0_i32_6 : i32 to index
    %c0_7 = arith.constant 0 : index
    %c0_8 = arith.constant 0 : index
    %7 = vector.load %arg2[%6, %c0_7, %c0_8] : memref<4x2x1xf32, #tpu.memory_space<vmem>>, vector<1x2x1xf32>
    %8 = vector.shape_cast %7 : vector<1x2x1xf32> to vector<2x1xf32>
    %9 = vector.broadcast %8 : vector<2x1xf32> to vector<2x32xf32>
    %10 = arith.mulf %4, %9 : vector<2x32xf32>
    %11 = vector.broadcast %8 : vector<2x1xf32> to vector<2x32xf32>
    %12 = arith.mulf %5, %11 : vector<2x32xf32>
    %13 = arith.index_cast %c0_i32_6 : i32 to index
    %c0_9 = arith.constant 0 : index
    %c0_10 = arith.constant 0 : index
    %14 = vector.load %arg1[%13, %c0_9, %c0_10] : memref<4x2x128xf32, #tpu.memory_space<vmem>>, vector<1x2x128xf32>
    %15 = vector.shape_cast %14 : vector<1x2x128xf32> to vector<2x128xf32>
    %cst = arith.constant dense<0.000000e+00> : vector<2x128xf32>
    %16 = tpu.matmul %10, %3, %cst {dimension_numbers = #tpu.dot_dimension_numbers<[1], [0], [0], [1], [0, 0, 1, 1], [], []>} : vector<2x32xf32>, vector<32x128xf32>, vector<2x128xf32> -> vector<2x128xf32>
    %17 = arith.addf %15, %16 : vector<2x128xf32>
    %18 = vector.extract_strided_slice %17 {offsets = [0, 0], sizes = [2, 32], strides = [1, 1]} : vector<2x128xf32> to vector<2x32xf32>
    %19 = vector.extract_strided_slice %17 {offsets = [0, 32], sizes = [2, 32], strides = [1, 1]} : vector<2x128xf32> to vector<2x32xf32>
    %20 = vector.extract_strided_slice %17 {offsets = [0, 64], sizes = [2, 32], strides = [1, 1]} : vector<2x128xf32> to vector<2x32xf32>
    %21 = vector.extract_strided_slice %17 {offsets = [0, 96], sizes = [2, 32], strides = [1, 1]} : vector<2x128xf32> to vector<2x32xf32>
    %cst_11 = arith.constant 1.000000e+00 : f32
    %22 = vector.broadcast %cst_11 : f32 to vector<2x32xf32>
    %23 = arith.addf %20, %22 : vector<2x32xf32>
    %24 = arith.negf %23 : vector<2x32xf32>
    %25 = math.exp %24 : vector<2x32xf32>
    %cst_12 = arith.constant 1.000000e+00 : f32
    %26 = vector.broadcast %cst_12 : f32 to vector<2x32xf32>
    %27 = arith.addf %26, %25 : vector<2x32xf32>
    %28 = arith.divf %26, %27 : vector<2x32xf32>
    %29 = arith.mulf %28, %12 : vector<2x32xf32>
    %30 = arith.negf %18 : vector<2x32xf32>
    %31 = math.exp %30 : vector<2x32xf32>
    %cst_13 = arith.constant 1.000000e+00 : f32
    %32 = vector.broadcast %cst_13 : f32 to vector<2x32xf32>
    %33 = arith.addf %32, %31 : vector<2x32xf32>
    %34 = arith.divf %32, %33 : vector<2x32xf32>
    %35 = math.tanh %19 : vector<2x32xf32>
    %36 = arith.mulf %34, %35 : vector<2x32xf32>
    %37 = arith.addf %29, %36 : vector<2x32xf32>
    %38 = arith.negf %21 : vector<2x32xf32>
    %39 = math.exp %38 : vector<2x32xf32>
    %cst_14 = arith.constant 1.000000e+00 : f32
    %40 = vector.broadcast %cst_14 : f32 to vector<2x32xf32>
    %41 = arith.addf %40, %39 : vector<2x32xf32>
    %42 = arith.divf %40, %41 : vector<2x32xf32>
    %43 = math.tanh %37 : vector<2x32xf32>
    %44 = arith.mulf %42, %43 : vector<2x32xf32>
    %45 = arith.index_cast %c0_i32_6 : i32 to index
    %c0_15 = arith.constant 0 : index
    %c0_16 = arith.constant 0 : index
    %46 = vector.load %arg6[%45, %c0_15, %c0_16] : memref<4x2x32xf32, #tpu.memory_space<vmem>>, vector<1x2x32xf32>
    %47 = vector.shape_cast %46 : vector<1x2x32xf32> to vector<2x32xf32>
    %48 = vector.shape_cast %44 : vector<2x32xf32> to vector<1x2x32xf32>
    tpu.vector_store %arg6[%45, %c0_15, %c0_16], %48 {strides = array<i32>} : memref<4x2x32xf32, #tpu.memory_space<vmem>>, vector<1x2x32xf32>,
    %c1_i32 = arith.constant 1 : i32
    %49 = arith.index_cast %c1_i32 : i32 to index
    %c0_17 = arith.constant 0 : index
    %c0_18 = arith.constant 0 : index
    %50 = vector.load %arg2[%49, %c0_17, %c0_18] : memref<4x2x1xf32, #tpu.memory_space<vmem>>, vector<1x2x1xf32>
    %51 = vector.shape_cast %50 : vector<1x2x1xf32> to vector<2x1xf32>
    %52 = vector.broadcast %51 : vector<2x1xf32> to vector<2x32xf32>
    %53 = arith.mulf %44, %52 : vector<2x32xf32>
    %54 = vector.broadcast %51 : vector<2x1xf32> to vector<2x32xf32>
    %55 = arith.mulf %37, %54 : vector<2x32xf32>
    %56 = arith.index_cast %c1_i32 : i32 to index
    %c0_19 = arith.constant 0 : index
    %c0_20 = arith.constant 0 : index
    %57 = vector.load %arg1[%56, %c0_19, %c0_20] : memref<4x2x128xf32, #tpu.memory_space<vmem>>, vector<1x2x128xf32>
    %58 = vector.shape_cast %57 : vector<1x2x128xf32> to vector<2x128xf32>
    %cst_21 = arith.constant dense<0.000000e+00> : vector<2x128xf32>
    %59 = tpu.matmul %53, %3, %cst_21 {dimension_numbers = #tpu.dot_dimension_numbers<[1], [0], [0], [1], [0, 0, 1, 1], [], []>} : vector<2x32xf32>, vector<32x128xf32>, vector<2x128xf32> -> vector<2x128xf32>
    %60 = arith.addf %58, %59 : vector<2x128xf32>
    %61 = vector.extract_strided_slice %60 {offsets = [0, 0], sizes = [2, 32], strides = [1, 1]} : vector<2x128xf32> to vector<2x32xf32>
    %62 = vector.extract_strided_slice %60 {offsets = [0, 32], sizes = [2, 32], strides = [1, 1]} : vector<2x128xf32> to vector<2x32xf32>
    %63 = vector.extract_strided_slice %60 {offsets = [0, 64], sizes = [2, 32], strides = [1, 1]} : vector<2x128xf32> to vector<2x32xf32>
    %64 = vector.extract_strided_slice %60 {offsets = [0, 96], sizes = [2, 32], strides = [1, 1]} : vector<2x128xf32> to vector<2x32xf32>
    %cst_22 = arith.constant 1.000000e+00 : f32
    %65 = vector.broadcast %cst_22 : f32 to vector<2x32xf32>
    %66 = arith.addf %63, %65 : vector<2x32xf32>
    %67 = arith.negf %66 : vector<2x32xf32>
    %68 = math.exp %67 : vector<2x32xf32>
    %cst_23 = arith.constant 1.000000e+00 : f32
    %69 = vector.broadcast %cst_23 : f32 to vector<2x32xf32>
    %70 = arith.addf %69, %68 : vector<2x32xf32>
    %71 = arith.divf %69, %70 : vector<2x32xf32>
    %72 = arith.mulf %71, %55 : vector<2x32xf32>
    %73 = arith.negf %61 : vector<2x32xf32>
    %74 = math.exp %73 : vector<2x32xf32>
    %cst_24 = arith.constant 1.000000e+00 : f32
    %75 = vector.broadcast %cst_24 : f32 to vector<2x32xf32>
    %76 = arith.addf %75, %74 : vector<2x32xf32>
    %77 = arith.divf %75, %76 : vector<2x32xf32>
    %78 = math.tanh %62 : vector<2x32xf32>
    %79 = arith.mulf %77, %78 : vector<2x32xf32>
    %80 = arith.addf %72, %79 : vector<2x32xf32>
    %81 = arith.negf %64 : vector<2x32xf32>
    %82 = math.exp %81 : vector<2x32xf32>
    %cst_25 = arith.constant 1.000000e+00 : f32
    %83 = vector.broadcast %cst_25 : f32 to vector<2x32xf32>
    %84 = arith.addf %83, %82 : vector<2x32xf32>
    %85 = arith.divf %83, %84 : vector<2x32xf32>
    %86 = math.tanh %80 : vector<2x32xf32>
    %87 = arith.mulf %85, %86 : vector<2x32xf32>
    %88 = arith.index_cast %c1_i32 : i32 to index
    %c0_26 = arith.constant 0 : index
    %c0_27 = arith.constant 0 : index
    %89 = vector.load %arg6[%88, %c0_26, %c0_27] : memref<4x2x32xf32, #tpu.memory_space<vmem>>, vector<1x2x32xf32>
    %90 = vector.shape_cast %89 : vector<1x2x32xf32> to vector<2x32xf32>
    %91 = vector.shape_cast %87 : vector<2x32xf32> to vector<1x2x32xf32>
    tpu.vector_store %arg6[%88, %c0_26, %c0_27], %91 {strides = array<i32>} : memref<4x2x32xf32, #tpu.memory_space<vmem>>, vector<1x2x32xf32>,
    %c2_i32 = arith.constant 2 : i32
    %92 = arith.index_cast %c2_i32 : i32 to index
    %c0_28 = arith.constant 0 : index
    %c0_29 = arith.constant 0 : index
    %93 = vector.load %arg2[%92, %c0_28, %c0_29] : memref<4x2x1xf32, #tpu.memory_space<vmem>>, vector<1x2x1xf32>
    %94 = vector.shape_cast %93 : vector<1x2x1xf32> to vector<2x1xf32>
    %95 = vector.broadcast %94 : vector<2x1xf32> to vector<2x32xf32>
    %96 = arith.mulf %87, %95 : vector<2x32xf32>
    %97 = vector.broadcast %94 : vector<2x1xf32> to vector<2x32xf32>
    %98 = arith.mulf %80, %97 : vector<2x32xf32>
    %99 = arith.index_cast %c2_i32 : i32 to index
    %c0_30 = arith.constant 0 : index
    %c0_31 = arith.constant 0 : index
    %100 = vector.load %arg1[%99, %c0_30, %c0_31] : memref<4x2x128xf32, #tpu.memory_space<vmem>>, vector<1x2x128xf32>
    %101 = vector.shape_cast %100 : vector<1x2x128xf32> to vector<2x128xf32>
    %cst_32 = arith.constant dense<0.000000e+00> : vector<2x128xf32>
    %102 = tpu.matmul %96, %3, %cst_32 {dimension_numbers = #tpu.dot_dimension_numbers<[1], [0], [0], [1], [0, 0, 1, 1], [], []>} : vector<2x32xf32>, vector<32x128xf32>, vector<2x128xf32> -> vector<2x128xf32>
    %103 = arith.addf %101, %102 : vector<2x128xf32>
    %104 = vector.extract_strided_slice %103 {offsets = [0, 0], sizes = [2, 32], strides = [1, 1]} : vector<2x128xf32> to vector<2x32xf32>
    %105 = vector.extract_strided_slice %103 {offsets = [0, 32], sizes = [2, 32], strides = [1, 1]} : vector<2x128xf32> to vector<2x32xf32>
    %106 = vector.extract_strided_slice %103 {offsets = [0, 64], sizes = [2, 32], strides = [1, 1]} : vector<2x128xf32> to vector<2x32xf32>
    %107 = vector.extract_strided_slice %103 {offsets = [0, 96], sizes = [2, 32], strides = [1, 1]} : vector<2x128xf32> to vector<2x32xf32>
    %cst_33 = arith.constant 1.000000e+00 : f32
    %108 = vector.broadcast %cst_33 : f32 to vector<2x32xf32>
    %109 = arith.addf %106, %108 : vector<2x32xf32>
    %110 = arith.negf %109 : vector<2x32xf32>
    %111 = math.exp %110 : vector<2x32xf32>
    %cst_34 = arith.constant 1.000000e+00 : f32
    %112 = vector.broadcast %cst_34 : f32 to vector<2x32xf32>
    %113 = arith.addf %112, %111 : vector<2x32xf32>
    %114 = arith.divf %112, %113 : vector<2x32xf32>
    %115 = arith.mulf %114, %98 : vector<2x32xf32>
    %116 = arith.negf %104 : vector<2x32xf32>
    %117 = math.exp %116 : vector<2x32xf32>
    %cst_35 = arith.constant 1.000000e+00 : f32
    %118 = vector.broadcast %cst_35 : f32 to vector<2x32xf32>
    %119 = arith.addf %118, %117 : vector<2x32xf32>
    %120 = arith.divf %118, %119 : vector<2x32xf32>
    %121 = math.tanh %105 : vector<2x32xf32>
    %122 = arith.mulf %120, %121 : vector<2x32xf32>
    %123 = arith.addf %115, %122 : vector<2x32xf32>
    %124 = arith.negf %107 : vector<2x32xf32>
    %125 = math.exp %124 : vector<2x32xf32>
    %cst_36 = arith.constant 1.000000e+00 : f32
    %126 = vector.broadcast %cst_36 : f32 to vector<2x32xf32>
    %127 = arith.addf %126, %125 : vector<2x32xf32>
    %128 = arith.divf %126, %127 : vector<2x32xf32>
    %129 = math.tanh %123 : vector<2x32xf32>
    %130 = arith.mulf %128, %129 : vector<2x32xf32>
    %131 = arith.index_cast %c2_i32 : i32 to index
    %c0_37 = arith.constant 0 : index
    %c0_38 = arith.constant 0 : index
    %132 = vector.load %arg6[%131, %c0_37, %c0_38] : memref<4x2x32xf32, #tpu.memory_space<vmem>>, vector<1x2x32xf32>
    %133 = vector.shape_cast %132 : vector<1x2x32xf32> to vector<2x32xf32>
    %134 = vector.shape_cast %130 : vector<2x32xf32> to vector<1x2x32xf32>
    tpu.vector_store %arg6[%131, %c0_37, %c0_38], %134 {strides = array<i32>} : memref<4x2x32xf32, #tpu.memory_space<vmem>>, vector<1x2x32xf32>,
    %c3_i32 = arith.constant 3 : i32
    %135 = arith.index_cast %c3_i32 : i32 to index
    %c0_39 = arith.constant 0 : index
    %c0_40 = arith.constant 0 : index
    %136 = vector.load %arg2[%135, %c0_39, %c0_40] : memref<4x2x1xf32, #tpu.memory_space<vmem>>, vector<1x2x1xf32>
    %137 = vector.shape_cast %136 : vector<1x2x1xf32> to vector<2x1xf32>
    %138 = vector.broadcast %137 : vector<2x1xf32> to vector<2x32xf32>
    %139 = arith.mulf %130, %138 : vector<2x32xf32>
    %140 = vector.broadcast %137 : vector<2x1xf32> to vector<2x32xf32>
    %141 = arith.mulf %123, %140 : vector<2x32xf32>
    %142 = arith.index_cast %c3_i32 : i32 to index
    %c0_41 = arith.constant 0 : index
    %c0_42 = arith.constant 0 : index
    %143 = vector.load %arg1[%142, %c0_41, %c0_42] : memref<4x2x128xf32, #tpu.memory_space<vmem>>, vector<1x2x128xf32>
    %144 = vector.shape_cast %143 : vector<1x2x128xf32> to vector<2x128xf32>
    %cst_43 = arith.constant dense<0.000000e+00> : vector<2x128xf32>
    %145 = tpu.matmul %139, %3, %cst_43 {dimension_numbers = #tpu.dot_dimension_numbers<[1], [0], [0], [1], [0, 0, 1, 1], [], []>} : vector<2x32xf32>, vector<32x128xf32>, vector<2x128xf32> -> vector<2x128xf32>
    %146 = arith.addf %144, %145 : vector<2x128xf32>
    %147 = vector.extract_strided_slice %146 {offsets = [0, 0], sizes = [2, 32], strides = [1, 1]} : vector<2x128xf32> to vector<2x32xf32>
    %148 = vector.extract_strided_slice %146 {offsets = [0, 32], sizes = [2, 32], strides = [1, 1]} : vector<2x128xf32> to vector<2x32xf32>
    %149 = vector.extract_strided_slice %146 {offsets = [0, 64], sizes = [2, 32], strides = [1, 1]} : vector<2x128xf32> to vector<2x32xf32>
    %150 = vector.extract_strided_slice %146 {offsets = [0, 96], sizes = [2, 32], strides = [1, 1]} : vector<2x128xf32> to vector<2x32xf32>
    %cst_44 = arith.constant 1.000000e+00 : f32
    %151 = vector.broadcast %cst_44 : f32 to vector<2x32xf32>
    %152 = arith.addf %149, %151 : vector<2x32xf32>
    %153 = arith.negf %152 : vector<2x32xf32>
    %154 = math.exp %153 : vector<2x32xf32>
    %cst_45 = arith.constant 1.000000e+00 : f32
    %155 = vector.broadcast %cst_45 : f32 to vector<2x32xf32>
    %156 = arith.addf %155, %154 : vector<2x32xf32>
    %157 = arith.divf %155, %156 : vector<2x32xf32>
    %158 = arith.mulf %157, %141 : vector<2x32xf32>
    %159 = arith.negf %147 : vector<2x32xf32>
    %160 = math.exp %159 : vector<2x32xf32>
    %cst_46 = arith.constant 1.000000e+00 : f32
    %161 = vector.broadcast %cst_46 : f32 to vector<2x32xf32>
    %162 = arith.addf %161, %160 : vector<2x32xf32>
    %163 = arith.divf %161, %162 : vector<2x32xf32>
    %164 = math.tanh %148 : vector<2x32xf32>
    %165 = arith.mulf %163, %164 : vector<2x32xf32>
    %166 = arith.addf %158, %165 : vector<2x32xf32>
    %167 = arith.negf %150 : vector<2x32xf32>
    %168 = math.exp %167 : vector<2x32xf32>
    %cst_47 = arith.constant 1.000000e+00 : f32
    %169 = vector.broadcast %cst_47 : f32 to vector<2x32xf32>
    %170 = arith.addf %169, %168 : vector<2x32xf32>
    %171 = arith.divf %169, %170 : vector<2x32xf32>
    %172 = math.tanh %166 : vector<2x32xf32>
    %173 = arith.mulf %171, %172 : vector<2x32xf32>
    %174 = arith.index_cast %c3_i32 : i32 to index
    %c0_48 = arith.constant 0 : index
    %c0_49 = arith.constant 0 : index
    %175 = vector.load %arg6[%174, %c0_48, %c0_49] : memref<4x2x32xf32, #tpu.memory_space<vmem>>, vector<1x2x32xf32>
    %176 = vector.shape_cast %175 : vector<1x2x32xf32> to vector<2x32xf32>
    %177 = vector.shape_cast %173 : vector<2x32xf32> to vector<1x2x32xf32>
    tpu.vector_store %arg6[%174, %c0_48, %c0_49], %177 {strides = array<i32>} : memref<4x2x32xf32, #tpu.memory_space<vmem>>, vector<1x2x32xf32>,
    %c4_i32 = arith.constant 4 : i32
    %c0_50 = arith.constant 0 : index
    %c0_51 = arith.constant 0 : index
    %178 = vector.load %arg10[%c0_50, %c0_51] : memref<2x32xf32, #tpu.memory_space<vmem>>, vector<2x32xf32>
    tpu.vector_store %arg10[%c0_50, %c0_51], %173 {strides = array<i32>} : memref<2x32xf32, #tpu.memory_space<vmem>>, vector<2x32xf32>,
    %c0_52 = arith.constant 0 : index
    %c0_53 = arith.constant 0 : index
    %179 = vector.load %arg11[%c0_52, %c0_53] : memref<2x32xf32, #tpu.memory_space<vmem>>, vector<2x32xf32>
    tpu.vector_store %arg11[%c0_52, %c0_53], %166 {strides = array<i32>} : memref<2x32xf32, #tpu.memory_space<vmem>>, vector<2x32xf32>,
    %c1_i32_54 = arith.constant 1 : i32
    %180 = arith.cmpi eq, %arg0, %c1_i32_54 : i32
    %181 = arith.extui %180 : i1 to i32
    %c0_i32_55 = arith.constant 0 : i32
    %182 = arith.cmpi ne, %181, %c0_i32_55 : i32
    scf.if %182 {
      %c0_56 = arith.constant 0 : index
      %c0_57 = arith.constant 0 : index
      %183 = vector.load %arg7[%c0_56, %c0_57] : memref<2x32xf32, #tpu.memory_space<vmem>>, vector<2x32xf32>
      tpu.vector_store %arg7[%c0_56, %c0_57], %173 {strides = array<i32>} : memref<2x32xf32, #tpu.memory_space<vmem>>, vector<2x32xf32>,
      %c0_58 = arith.constant 0 : index
      %c0_59 = arith.constant 0 : index
      %184 = vector.load %arg8[%c0_58, %c0_59] : memref<2x32xf32, #tpu.memory_space<vmem>>, vector<2x32xf32>
      tpu.vector_store %arg8[%c0_58, %c0_59], %166 {strides = array<i32>} : memref<2x32xf32, #tpu.memory_space<vmem>>, vector<2x32xf32>,
    } else {
    }
    return
  }
  func.func @transform_0(%arg0: i32) -> (i32, i32, i32) {
    %c0_i32 = arith.constant 0 : i32
    %c0_i32_0 = arith.constant 0 : i32
    %c0_i32_1 = arith.constant 0 : i32
    return %arg0, %c0_i32, %c0_i32_0 : i32, i32, i32
  }
  func.func @transform_1(%arg0: i32) -> (i32, i32, i32) {
    %c0_i32 = arith.constant 0 : i32
    %c0_i32_0 = arith.constant 0 : i32
    %c0_i32_1 = arith.constant 0 : i32
    return %arg0, %c0_i32, %c0_i32_0 : i32, i32, i32
  }
  func.func @transform_2(%arg0: i32) -> (i32, i32) {
    %c0_i32 = arith.constant 0 : i32
    %c0_i32_0 = arith.constant 0 : i32
    %c0_i32_1 = arith.constant 0 : i32
    return %c0_i32, %c0_i32_0 : i32, i32
  }
  func.func @transform_3(%arg0: i32) -> (i32, i32) {
    %c0_i32 = arith.constant 0 : i32
    %c0_i32_0 = arith.constant 0 : i32
    %c0_i32_1 = arith.constant 0 : i32
    return %c0_i32, %c0_i32_0 : i32, i32
  }
  func.func @transform_5(%arg0: i32) -> (i32, i32, i32) {
    %c0_i32 = arith.constant 0 : i32
    %c0_i32_0 = arith.constant 0 : i32
    %c0_i32_1 = arith.constant 0 : i32
    return %arg0, %c0_i32, %c0_i32_0 : i32, i32, i32
  }
  func.func @transform_6(%arg0: i32) -> (i32, i32) {
    %c0_i32 = arith.constant 0 : i32
    %c0_i32_0 = arith.constant 0 : i32
    %c0_i32_1 = arith.constant 0 : i32
    return %c0_i32, %c0_i32_0 : i32, i32
  }
  func.func @transform_7(%arg0: i32) -> (i32, i32) {
    %c0_i32 = arith.constant 0 : i32
    %c0_i32_0 = arith.constant 0 : i32
    %c0_i32_1 = arith.constant 0 : i32
    return %c0_i32, %c0_i32_0 : i32, i32
  }
}

</mosaic_0001>

<llo_original>
// kernel: tpu_custom_call.1
$region0: #{tpu_custom_call.1}
  #allocation0 [shape = 'u32[]', space=smem, size = 0x4, offset = 0x4, fixed_abs, tag = 'smem constant byte address 0x4 - core index']
  #allocation1 [shape = 'u32[144,128]{1,0:T(1,128)}', space=vmem, size = 0x12000, scoped, tag = 'internal scratch']
  #allocation2 [shape = 'f32[32,128]{1,0:T(8,128)}', space=vmem, size = 0x4000, scoped, tag = 'scratch operand']
  #allocation3 [shape = 'f32[2,32]{1,0:T(2,128)}', space=vmem, size = 0x400, scoped, tag = 'scratch operand']
  #allocation4 [shape = 'f32[2,32]{1,0:T(2,128)}', space=vmem, size = 0x400, scoped, tag = 'scratch operand']
  #allocation5 [shape = 's32[1]{0}', space=sflag, size = 0x4, scoped, tag = 'scratch operand']
  #allocation15 [shape = 's32[]', space=sflag, size = 0x4, offset = 0, fixed_abs, tag = 'sflag constant byte address 0x0 - dummy sync flag']
  #allocation16 [shape = 's32[]', space=sflag, size = 0x4, offset = 0, fixed_abs, tag = 'sflag constant byte address 0x0 - dummy sync flag']
  #allocation17 [shape = 'u32[]', space=smem, size = 0x4, offset = 0x44, fixed_abs, tag = 'smem constant byte address 0x44 - assertion arg 0']
  #allocation18 [shape = 'u32[]', space=smem, size = 0x4, offset = 0x48, fixed_abs, tag = 'smem constant byte address 0x48 - assertion arg 1']
  %s0 = inlined_call_operand.vmem [shape: f32[8,2,128], index: 0, kind: input, shape index: {}]
  %s1 = inlined_call_operand.vmem [shape: f32[8,2,1], index: 1, kind: input, shape index: {}]
  %s2 = inlined_call_operand.hbm [shape: f32[2,32], index: 2, kind: input, shape index: {}, may-alias: {2,6}]
  %s3 = inlined_call_operand.hbm [shape: f32[2,32], index: 3, kind: input, shape index: {}, may-alias: {3,7}]
  %s4 = inlined_call_operand.hbm [shape: f32[32,128], index: 4, kind: input, shape index: {}]
  %s5 = inlined_call_operand.hbm [shape: f32[8,2,32], index: 5, kind: output, shape index: {0}]
  %s6 = inlined_call_operand.hbm [shape: f32[2,32], index: 6, kind: output, shape index: {1}, may-alias: {2,6}]
  %s7 = inlined_call_operand.hbm [shape: f32[2,32], index: 7, kind: output, shape index: {2}, may-alias: {3,7}]
  %8 = xla_tuple %s5, %s6, %s7
  %s9 = sld [smem:[#allocation0]]
  $region85: #{tpu_custom_call.1} parent=0
    _
  %s11 = ssub.s32 1, %s9
  %s12 = scalar_select 0, %s11, %s9
  $region1: #{tpu_custom_call.1} parent=0
    #allocation6 [shape = 'u8[1024]{0}', space=vmem, size = 0x400, scoped, tag = 'input window, operand 2, single buffered']
    #allocation7 [shape = 's32[2]{0}', space=sflag, size = 0x8, scoped, tag = 'scoped memory for tpu_custom_call.1']
    #allocation8 [shape = 's32[2]{0}', space=sflag, size = 0x8, scoped, tag = 'scoped memory for tpu_custom_call.1']
    #allocation9 [shape = 'u8[1024]{0}', space=vmem, size = 0x400, scoped, tag = 'input window, operand 3, single buffered']
    #allocation10 [shape = 's32[1]{0}', space=sflag, size = 0x4, scoped, tag = 'scoped memory for tpu_custom_call.1']
    #allocation11 [shape = 'u8[8192]{0}', space=vmem, size = 0x2000, scoped, tag = 'output window, operand 0']
    #allocation12 [shape = 'u8[1024]{0}', space=vmem, size = 0x400, scoped, tag = 'output window, operand 1, single buffered']
    #allocation13 [shape = 's32[1]{0}', space=sflag, size = 0x4, scoped, tag = 'scoped memory for tpu_custom_call.1']
    #allocation14 [shape = 'u8[1024]{0}', space=vmem, size = 0x400, scoped, tag = 'output window, operand 2, single buffered']
    %13 = vsyncpa [#allocation7], 0
    %14 = vsyncpa [#allocation10], 0
    %15 = vsyncpa [#allocation8], 0
    %s16 = scalar_lea.sflag [#allocation8], 1
    %17 = vsyncpa %s16, 0
    %18 = vsyncpa [#allocation13], 0
    loop: start=0, step=1, limit=4
    $region2: #{tpu_custom_call.1} parent=1 // loop_pre_header
      _
    $region3: #{tpu_custom_call.1} parent=1 // loop_header
      %s20 = sphi 0, %s24
      %p21 = scmp.ge.s32.totalorder %s20, 4
      %s30 = sphi 0, %s32
      %s33 = sphi 0, %s30
      %s34 = sphi 0, %s33
      %s50 = sphi 0, %s34
      %s56 = sphi 0, %s58
      %s59 = sphi 0, %s56
      %s60 = sphi 0, %s59
      %s76 = sphi 0, %s60
      %s80 = sphi 0, %s80
      %s82 = sphi 0, %s80
      %s83 = sphi 0, %s82
      %s97 = sphi 0, %s83
      %s101 = sphi 0, %s101
      %s103 = sphi 0, %s101
      %s104 = sphi 0, %s103
      %s118 = sphi 0, %s104
      %s124 = sphi 0, %s126
      %s127 = sphi 0, %s124
      %s128 = sphi 0, %s127
      %s144 = sphi 0, %s128
      %s148 = sphi 0, %s148
      %s150 = sphi 0, %s148
      %s151 = sphi 0, %s150
      %s165 = sphi 0, %s151
      %s169 = sphi 0, %s169
      %s171 = sphi 0, %s169
      %s172 = sphi 0, %s171
      %s186 = sphi 0, %s172
    $region4: #{tpu_custom_call.1} parent=1 // loop_header_branch
      %23 = sbr.rel (%p21) target = $region8
    $region5: #{tpu_custom_call.1} parent=1 // loop_body
      %s25 = ssub.s32 %s20, 1
      %s26 = ssub.s32 %s20, 2
      %s27 = sadd.s32 %s20, 1
      %s28 = ssub.s32 %s20, %s27
      %p29 = scmp.eq.s32.totalorder %s28, 0
      %s31 = sadd.s32 %s30, 1
      %s32 = scalar_select %p29, %s30, %s31
      %p35 = pneg %p29
      %p36 = scmp.eq.s32.totalorder %s20, 1
      %p37 = por %p35, %p36
      %p38 = scmp.ne.s32.totalorder %s30, %s33
      %p39 = scmp.eq.s32.totalorder %s20, 0
      %p40 = por %p38, %p39
      %p41 = scmp.ne.s32.totalorder %s30, %s33
      %p42 = scmp.eq.s32.totalorder %s25, 1
      %p43 = por %p41, %p42
      %p44 = scmp.ne.s32.totalorder %s33, %s34
      %p45 = scmp.eq.s32.totalorder %s25, 0
      %p46 = por %p44, %p45
      %p47 = scmp.ne.s32.totalorder %s33, %s34
      %p48 = scmp.eq.s32.totalorder %s26, 1
      %p49 = por %p47, %p48
      %p51 = scmp.ne.s32.totalorder %s34, %s50
      %p52 = scmp.eq.s32.totalorder %s26, 0
      %p53 = por %p51, %p52
      %s54 = ssub.s32 %s20, %s27
      %p55 = scmp.eq.s32.totalorder %s54, 0
      %s57 = sadd.s32 %s56, 1
      %s58 = scalar_select %p55, %s56, %s57
      %p61 = pneg %p55
      %p62 = scmp.eq.s32.totalorder %s20, 1
      %p63 = por %p61, %p62
      %p64 = scmp.ne.s32.totalorder %s56, %s59
      %p65 = scmp.eq.s32.totalorder %s20, 0
      %p66 = por %p64, %p65
      %p67 = scmp.ne.s32.totalorder %s56, %s59
      %p68 = scmp.eq.s32.totalorder %s25, 1
      %p69 = por %p67, %p68
      %p70 = scmp.ne.s32.totalorder %s59, %s60
      %p71 = scmp.eq.s32.totalorder %s25, 0
      %p72 = por %p70, %p71
      %p73 = scmp.ne.s32.totalorder %s59, %s60
      %p74 = scmp.eq.s32.totalorder %s26, 1
      %p75 = por %p73, %p74
      %p77 = scmp.ne.s32.totalorder %s60, %s76
      %p78 = scmp.eq.s32.totalorder %s26, 0
      %p79 = por %p77, %p78
      %s81 = sadd.s32 %s80, 1
      %p84 = scmp.eq.s32.totalorder %s20, 1
      %p85 = scmp.ne.s32.totalorder %s80, %s82
      %p86 = scmp.eq.s32.totalorder %s20, 0
      %p87 = por %p85, %p86
      %p88 = scmp.ne.s32.totalorder %s80, %s82
      %p89 = scmp.eq.s32.totalorder %s25, 1
      %p90 = por %p88, %p89
      %p91 = scmp.ne.s32.totalorder %s82, %s83
      %p92 = scmp.eq.s32.totalorder %s25, 0
      %p93 = por %p91, %p92
      %p94 = scmp.ne.s32.totalorder %s82, %s83
      %p95 = scmp.eq.s32.totalorder %s26, 1
      %p96 = por %p94, %p95
      %p98 = scmp.ne.s32.totalorder %s83, %s97
      %p99 = scmp.eq.s32.totalorder %s26, 0
      %p100 = por %p98, %p99
      %s102 = sadd.s32 %s101, 1
      %p105 = scmp.eq.s32.totalorder %s20, 1
      %p106 = scmp.ne.s32.totalorder %s101, %s103
      %p107 = scmp.eq.s32.totalorder %s20, 0
      %p108 = por %p106, %p107
      %p109 = scmp.ne.s32.totalorder %s101, %s103
      %p110 = scmp.eq.s32.totalorder %s25, 1
      %p111 = por %p109, %p110
      %p112 = scmp.ne.s32.totalorder %s103, %s104
      %p113 = scmp.eq.s32.totalorder %s25, 0
      %p114 = por %p112, %p113
      %p115 = scmp.ne.s32.totalorder %s103, %s104
      %p116 = scmp.eq.s32.totalorder %s26, 1
      %p117 = por %p115, %p116
      %p119 = scmp.ne.s32.totalorder %s104, %s118
      %p120 = scmp.eq.s32.totalorder %s26, 0
      %p121 = por %p119, %p120
      %s122 = ssub.s32 %s20, %s27
      %p123 = scmp.eq.s32.totalorder %s122, 0
      %s125 = sadd.s32 %s124, 1
      %s126 = scalar_select %p123, %s124, %s125
      %p129 = pneg %p123
      %p130 = scmp.eq.s32.totalorder %s20, 1
      %p131 = por %p129, %p130
      %p132 = scmp.ne.s32.totalorder %s124, %s127
      %p133 = scmp.eq.s32.totalorder %s20, 0
      %p134 = por %p132, %p133
      %p135 = scmp.ne.s32.totalorder %s124, %s127
      %p136 = scmp.eq.s32.totalorder %s25, 1
      %p137 = por %p135, %p136
      %p138 = scmp.ne.s32.totalorder %s127, %s128
      %p139 = scmp.eq.s32.totalorder %s25, 0
      %p140 = por %p138, %p139
      %p141 = scmp.ne.s32.totalorder %s127, %s128
      %p142 = scmp.eq.s32.totalorder %s26, 1
      %p143 = por %p141, %p142
      %p145 = scmp.ne.s32.totalorder %s128, %s144
      %p146 = scmp.eq.s32.totalorder %s26, 0
      %p147 = por %p145, %p146
      %s149 = sadd.s32 %s148, 1
      %p152 = scmp.eq.s32.totalorder %s20, 1
      %p153 = scmp.ne.s32.totalorder %s148, %s150
      %p154 = scmp.eq.s32.totalorder %s20, 0
      %p155 = por %p153, %p154
      %p156 = scmp.ne.s32.totalorder %s148, %s150
      %p157 = scmp.eq.s32.totalorder %s25, 1
      %p158 = por %p156, %p157
      %p159 = scmp.ne.s32.totalorder %s150, %s151
      %p160 = scmp.eq.s32.totalorder %s25, 0
      %p161 = por %p159, %p160
      %p162 = scmp.ne.s32.totalorder %s150, %s151
      %p163 = scmp.eq.s32.totalorder %s26, 1
      %p164 = por %p162, %p163
      %p166 = scmp.ne.s32.totalorder %s151, %s165
      %p167 = scmp.eq.s32.totalorder %s26, 0
      %p168 = por %p166, %p167
      %s170 = sadd.s32 %s169, 1
      %p173 = scmp.eq.s32.totalorder %s20, 1
      %p174 = scmp.ne.s32.totalorder %s169, %s171
      %p175 = scmp.eq.s32.totalorder %s20, 0
      %p176 = por %p174, %p175
      %p177 = scmp.ne.s32.totalorder %s169, %s171
      %p178 = scmp.eq.s32.totalorder %s25, 1
      %p179 = por %p177, %p178
      %p180 = scmp.ne.s32.totalorder %s171, %s172
      %p181 = scmp.eq.s32.totalorder %s25, 0
      %p182 = por %p180, %p181
      %p183 = scmp.ne.s32.totalorder %s171, %s172
      %p184 = scmp.eq.s32.totalorder %s26, 1
      %p185 = por %p183, %p184
      %p187 = scmp.ne.s32.totalorder %s172, %s186
      %p188 = scmp.eq.s32.totalorder %s26, 0
      %p189 = por %p187, %p188
      %p190 = scmp.le.s32.totalorder 1, %s20
      %p191 = scmp.lt.s32.totalorder %s20, 3
      %p192 = pnand %p190, %p191
      %p193 = pneg %p192
      // Predicated region
      $region9: #{tpu_custom_call.1} parent=5 // pred_check
        _
      $region10: #{tpu_custom_call.1} parent=5 // pred_check_branch
        %195 = sbr.rel (%p192) target = $region12
      $region11: #{tpu_custom_call.1} parent=5 // pred_region
        %s196 = ssub.s32 %s20, 1
        // Predicated region
        $region13: #{tpu_custom_call.1} parent=11 // pred_check
          %p197 = pneg %p93
        $region14: #{tpu_custom_call.1} parent=11 // pred_check_branch
          %199 = sbr.rel (%p197) target = $region16
        $region15: #{tpu_custom_call.1} parent=11 // pred_region
          %s201 = ssub.s32 32, 32
          %202 = vsyncadd [#allocation7], %s201
          %s204 = sshll.u32 [#allocation6], 4
          %s205 = int_to_ptr.vmem [resolvable:$true] %s204
          %207 = dma.hbm_to_vmem [thread:$0]  %s2, 32, %s205, [#allocation7]
        $region16: #{tpu_custom_call.1} parent=11 // pred_fallthru
          _
        // Predicated region
        $region17: #{tpu_custom_call.1} parent=11 // pred_check
          %p208 = pneg %p114
        $region18: #{tpu_custom_call.1} parent=11 // pred_check_branch
          %210 = sbr.rel (%p208) target = $region20
        $region19: #{tpu_custom_call.1} parent=11 // pred_region
          %s212 = ssub.s32 32, 32
          %213 = vsyncadd [#allocation10], %s212
          %s215 = sshll.u32 [#allocation9], 4
          %s216 = int_to_ptr.vmem [resolvable:$true] %s215
          %218 = dma.hbm_to_vmem [thread:$0]  %s3, 32, %s216, [#allocation10]
        $region20: #{tpu_custom_call.1} parent=11 // pred_fallthru
          _
      $region12: #{tpu_custom_call.1} parent=5 // pred_fallthru
        _
      %p219 = scmp.lt.s32.totalorder %s20, 2
      // Predicated region
      $region21: #{tpu_custom_call.1} parent=5 // pred_check
        %p220 = pneg %p219
      $region22: #{tpu_custom_call.1} parent=5 // pred_check_branch
        %222 = sbr.rel (%p220) target = $region24
      $region23: #{tpu_custom_call.1} parent=5 // pred_region
        // Predicated region
        $region25: #{tpu_custom_call.1} parent=23 // pred_check
          %p223 = pneg %p40
        $region26: #{tpu_custom_call.1} parent=23 // pred_check_branch
          %225 = sbr.rel (%p223) target = $region28
        $region27: #{tpu_custom_call.1} parent=23 // pred_region
          %s226 = smul.u32 4, %s20
          %p227 = scmp.lt.s32.totalorder %s226, 7
          %s228 = scalar_select %p227, %s226, 7
          %s229 = smul.addr %s228, 2
          %s230 = scalar_lea.vmem %s0, %s229
          %s231 = smul.u32 4, %s20
        $region28: #{tpu_custom_call.1} parent=23 // pred_fallthru
          _
        // Predicated region
        $region29: #{tpu_custom_call.1} parent=23 // pred_check
          %p232 = pneg %p66
        $region30: #{tpu_custom_call.1} parent=23 // pred_check_branch
          %234 = sbr.rel (%p232) target = $region32
        $region31: #{tpu_custom_call.1} parent=23 // pred_region
          %s235 = smul.u32 4, %s20
          %p236 = scmp.lt.s32.totalorder %s235, 7
          %s237 = scalar_select %p236, %s235, 7
          %s238 = smul.addr %s237, 2
          %s239 = scalar_lea.vmem %s1, %s238
          %s240 = smul.u32 4, %s20
        $region32: #{tpu_custom_call.1} parent=23 // pred_fallthru
          _
      $region24: #{tpu_custom_call.1} parent=5 // pred_fallthru
        _
      %p241 = scmp.le.s32.totalorder 1, %s20
      %p242 = scmp.lt.s32.totalorder %s20, 3
      %p243 = pnand %p241, %p242
      %p244 = pneg %p243
      // Predicated region
      $region33: #{tpu_custom_call.1} parent=5 // pred_check
        _
      $region34: #{tpu_custom_call.1} parent=5 // pred_check_branch
        %246 = sbr.rel (%p243) target = $region36
      $region35: #{tpu_custom_call.1} parent=5 // pred_region
        %s247 = ssub.s32 %s20, 1
        // Predicated region
        $region37: #{tpu_custom_call.1} parent=35 // pred_check
          %p248 = pneg %p93
        $region38: #{tpu_custom_call.1} parent=35 // pred_check_branch
          %250 = sbr.rel (%p248) target = $region40
        $region39: #{tpu_custom_call.1} parent=35 // pred_region
          %251 = dma.done [#allocation7], 32
        $region40: #{tpu_custom_call.1} parent=35 // pred_fallthru
          _
        // Predicated region
        $region41: #{tpu_custom_call.1} parent=35 // pred_check
          %p252 = pneg %p114
        $region42: #{tpu_custom_call.1} parent=35 // pred_check_branch
          %254 = sbr.rel (%p252) target = $region44
        $region43: #{tpu_custom_call.1} parent=35 // pred_region
          %255 = dma.done [#allocation10], 32
        $region44: #{tpu_custom_call.1} parent=35 // pred_fallthru
          _
        %s256 = smul.u32 4, %s25
        %p257 = scmp.lt.s32.totalorder %s256, 7
        %s258 = scalar_select %p257, %s256, 7
        %s259 = smul.addr %s258, 2
        %s260 = scalar_lea.vmem %s0, %s259
        %p261 = pneg %p46
        %p262 = pneg %p43
        %s263 = smul.u32 4, %s25
        %p264 = scmp.lt.s32.totalorder %s263, 7
        %s265 = scalar_select %p264, %s263, 7
        %s266 = smul.addr %s265, 2
        %s267 = scalar_lea.vmem %s1, %s266
        %p268 = pneg %p72
        %p269 = pneg %p69
        %p270 = pneg %p93
        %p271 = pneg %p90
        %p272 = pneg %p114
        %p273 = pneg %p111
        %p274 = pneg %p140
        %p275 = pneg %p137
        %s276 = sand.u32 %s127, 1
        %s277 = scalar_lea.sflag [#allocation8], %s276
        %s278 = sand.u32 %s127, 1
        %s279 = smul.addr %s278, 8
        %s280 = scalar_lea.vmem [#allocation11], %s279
        %p281 = pneg %p161
        %p282 = pneg %p158
        %p283 = pneg %p182
        %p284 = pneg %p179
        %s285 = smul.u32 4, %s25
        %p286 = scmp.lt.s32.totalorder %s285, 7
        %s287 = scalar_select %p286, %s285, 7
        %s288 = smul.addr %s287, 2
        %s289 = scalar_lea.vmem %s0, %s288
        %s290 = smul.u32 4, %s25
        %s291 = smul.u32 4, %s25
        %p292 = scmp.lt.s32.totalorder %s291, 7
        %s293 = scalar_select %p292, %s291, 7
        %s294 = smul.addr %s293, 2
        %s295 = scalar_lea.vmem %s1, %s294
        %s296 = smul.u32 4, %s25
        %s297 = smul.u32 4, %s25
        %p298 = scmp.eq.s32.totalorder %s25, 0
        // Predicated region
        $region45: #{tpu_custom_call.1} parent=35 // pred_check
          %p299 = pneg %p298
        $region46: #{tpu_custom_call.1} parent=35 // pred_check_branch
          %301 = sbr.rel (%p299) target = $region48
        $region47: #{tpu_custom_call.1} parent=35 // pred_region
          // Predicated region
          $region49: #{tpu_custom_call.1} parent=47 // pred_check
            _
          $region50: #{tpu_custom_call.1} parent=47 // pred_check_branch
            %303 = sbr.rel target = $region52
          $region51: #{tpu_custom_call.1} parent=47 // pred_region
            %304 = sst [smem:[#allocation17]] [#allocation16]
            %305 = sst [smem:[#allocation18]] [#allocation15]
          $region52: #{tpu_custom_call.1} parent=47 // pred_fallthru
            _
          %307 = shalt.err (0)
          %s309 = sshll.u32 [#allocation2], 4
          %s310 = int_to_ptr.vmem [resolvable:$true] %s309
          %312 = dma.hbm_to_vmem [thread:$0]  %s4, 512, %s310, [#allocation5]
          %v313 = vld [vmem:[#allocation6] sm:$0x3]
          %vm314 = vcmask 254976
          %315 = vst.msk [vmem:[#allocation3] sm:$0x3] %vm314, %v313
          %v316 = vld [vmem:[#allocation9] sm:$0x3]
          %317 = vst.msk [vmem:[#allocation4] sm:$0x3] %vm314, %v316
          %s318 = smul.u32 32, 1
          %s319 = sshll.u32 %s318, 4
          %320 = dma.done [#allocation5], %s319
        $region48: #{tpu_custom_call.1} parent=35 // pred_fallthru
          _
        %v321 = vld [vmem:[#allocation2] sm:$0xff]
        %v322 = vld [vmem:[#allocation2 + $0x8] sm:$0xff]
        %v323 = vld [vmem:[#allocation2 + $0x10] sm:$0xff]
        %v324 = vld [vmem:[#allocation2 + $0x18] sm:$0xff]
        %v325 = vld [vmem:[#allocation3] sm:$0x3]
        %v326 = vld [vmem:[#allocation4] sm:$0x3]
        %v327 = vld [vmem:[%s295] sm:$0x3]
        %329 = vset.pattern.permute.xlu0 0
        %330 = vperm.xlu0 %329, %v327
        %v331 = vpop.permute.xlu0 %330
        %v333 = vmul.f32 %v325, %v331
        %v334 = vmul.f32 %v326, %v331
        %v335 = vld [vmem:[%s289] sm:$0x3]
        %vm336 = vcmask 261120
        %v338 = vsel %vm336, %v333, 0
        %340 = vmatprep.subr.mxu0 0.0
        %341 = vmatpush1.msra.mxu0 0.0
        %342 = vmatprep.subr.mxu0 0.0
        %343 = vmatpush1.msra.mxu0 0.0
        %344 = vmatprep.subr.mxu0 0.0
        %345 = vmatpush1.msra.mxu0 0.0
        %346 = vmatprep.subr.mxu0 0.0
        %347 = vmatpush1.msra.mxu0 0.0
        %348 = vmatprep.subr.mxu0 0.0
        %349 = vmatpush1.msra.mxu0 0.0
        %350 = vmatprep.subr.mxu0 0.0
        %351 = vmatpush1.msra.mxu0 0.0
        %352 = vmatprep.subr.mxu0 0.0
        %353 = vmatpush1.msra.mxu0 0.0
        %354 = vmatprep.subr.mxu0 0.0
        %355 = vmatpush1.msra.mxu0 0.0
        %356 = vmatprep.subr.mxu0 0.0
        %357 = vmatpush1.msra.mxu0 0.0
        %358 = vmatprep.subr.mxu0 0.0
        %359 = vmatpush1.msra.mxu0 0.0
        %360 = vmatprep.subr.mxu0 0.0
        %361 = vmatpush1.msra.mxu0 0.0
        %362 = vmatprep.subr.mxu0 0.0
        %363 = vmatpush1.msra.mxu0 0.0
        %364 = vmatprep.subr.mxu0 0.0
        %365 = vmatpush1.msra.mxu0 %v324
        %366 = vmatprep.subr.mxu0 0.0
        %367 = vmatpush1.msra.mxu0 %v323
        %368 = vmatprep.subr.mxu0 0.0
        %369 = vmatpush1.msra.mxu0 %v322
        %370 = vmatprep.subr.mxu0 0.0
        %371 = vmatpush1.msra.mxu0 %v321
        %372 = vmatprep.subr.mxu0 0.0
        %373 = vmatpush2.msra.mxu0 0.0
        %374 = vmatprep.subr.mxu0 0.0
        %375 = vmatpush2.msra.mxu0 0.0
        %376 = vmatprep.subr.mxu0 0.0
        %377 = vmatpush2.msra.mxu0 0.0
        %378 = vmatprep.subr.mxu0 0.0
        %379 = vmatpush2.msra.mxu0 0.0
        %380 = vmatprep.subr.mxu0 0.0
        %381 = vmatpush2.msra.mxu0 0.0
        %382 = vmatprep.subr.mxu0 0.0
        %383 = vmatpush2.msra.mxu0 0.0
        %384 = vmatprep.subr.mxu0 0.0
        %385 = vmatpush2.msra.mxu0 0.0
        %386 = vmatprep.subr.mxu0 0.0
        %387 = vmatpush2.msra.mxu0 0.0
        %388 = vmatprep.subr.mxu0 0.0
        %389 = vmatpush2.msra.mxu0 0.0
        %390 = vmatprep.subr.mxu0 0.0
        %391 = vmatpush2.msra.mxu0 0.0
        %392 = vmatprep.subr.mxu0 0.0
        %393 = vmatpush2.msra.mxu0 0.0
        %394 = vmatprep.subr.mxu0 0.0
        %395 = vmatpush2.msra.mxu0 0.0
        %396 = vmatprep.subr.mxu0 0.0
        %397 = vmatpush2.msra.mxu0 0.0
        %398 = vmatprep.subr.mxu0 0.0
        %399 = vmatpush2.msra.mxu0 0.0
        %400 = vmatprep.subr.mxu0 0.0
        %401 = vmatpush2.msra.mxu0 0.0
        %402 = vmatprep.subr.mxu0 0.0
        %403 = vmatpush2.msra.mxu0 0.0
        %404 = vmatprep.mubr.f32.mxu0 0.0
        %405 = vmatmul.mubr.f32.gmra.mxu0 %v338
        %v406 = vpop.f32.mrf.mxu0
        %v407 = vadd.f32 0.0, %v406
        %v408 = vpop.f32.mrf.mxu0
        %409 = vdwg.mxu0
        %v410 = vadd.f32 %v335, %v407
        %v411 = vadd.f32 %v410, 1.0
        %v412 = vxor.u32 %v411, 2147483648
        %v413 = vmul.f32 %v412, 1.442695
        %v414 = vpow.pop %v413
        %v415 = vadd.f32 %v414, 1.0
        %v416 = vrcp.pop %v415
        %v417 = vmul.f32 1.0, %v416
        %419 = vrot.lane.b32.xlu0 %v334, 64
        %v420 = vpop.permute.xlu0 %419
        %v422 = vmul.f32 %v417, %v420
        %v423 = vxor.u32 %v410, 2147483648
        %v424 = vmul.f32 %v423, 1.442695
        %v425 = vpow.pop %v424
        %v426 = vadd.f32 %v425, 1.0
        %v427 = vrcp.pop %v426
        %v428 = vmul.f32 1.0, %v427
        %v429 = vtanh.pop %v410
        %431 = vrot.lane.b32.xlu0 %v429, 96
        %v432 = vpop.permute.xlu0 %431
        %v434 = vmul.f32 %v428, %v432
        %436 = vrot.lane.b32.xlu0 %v434, 64
        %v437 = vpop.permute.xlu0 %436
        %v439 = vadd.f32 %v422, %v437
        %v440 = vtanh.pop %v439
        %442 = vrot.lane.b32.xlu0 %v440, 32
        %v443 = vpop.permute.xlu0 %442
        %v445 = vmul.f32 %v428, %v443
        %447 = vrot.lane.b32.xlu0 %v445, 32
        %v448 = vpop.permute.xlu0 %447
        %vm450 = vcmask 254976
        %451 = vst.msk [vmem:[%s280] sm:$0x3] %vm450, %v448
        %s452 = scalar_lea.vmem %s295, 2
        %v453 = vld [vmem:[%s452] sm:$0x3]
        %455 = vset.pattern.permute.xlu0 0
        %456 = vperm.xlu0 %455, %v453
        %v457 = vpop.permute.xlu0 %456
        %v459 = vmul.f32 %v445, %v457
        %v460 = vmul.f32 %v439, %v457
        %s461 = scalar_lea.vmem %s289, 2
        %v462 = vld [vmem:[%s461] sm:$0x3]
        %464 = vrot.lane.b32.xlu0 %v459, 32
        %v465 = vpop.permute.xlu0 %464
        %v466 = vsel %vm336, %v465, 0
        %468 = vmatprep.subr.mxu0 0.0
        %469 = vmatpush1.msra.mxu0 0.0
        %470 = vmatprep.subr.mxu0 0.0
        %471 = vmatpush1.msra.mxu0 0.0
        %472 = vmatprep.subr.mxu0 0.0
        %473 = vmatpush1.msra.mxu0 0.0
        %474 = vmatprep.subr.mxu0 0.0
        %475 = vmatpush1.msra.mxu0 0.0
        %476 = vmatprep.subr.mxu0 0.0
        %477 = vmatpush1.msra.mxu0 0.0
        %478 = vmatprep.subr.mxu0 0.0
        %479 = vmatpush1.msra.mxu0 0.0
        %480 = vmatprep.subr.mxu0 0.0
        %481 = vmatpush1.msra.mxu0 0.0
        %482 = vmatprep.subr.mxu0 0.0
        %483 = vmatpush1.msra.mxu0 0.0
        %484 = vmatprep.subr.mxu0 0.0
        %485 = vmatpush1.msra.mxu0 0.0
        %486 = vmatprep.subr.mxu0 0.0
        %487 = vmatpush1.msra.mxu0 0.0
        %488 = vmatprep.subr.mxu0 0.0
        %489 = vmatpush1.msra.mxu0 0.0
        %490 = vmatprep.subr.mxu0 0.0
        %491 = vmatpush1.msra.mxu0 0.0
        %492 = vmatprep.subr.mxu0 0.0
        %493 = vmatpush1.msra.mxu0 %v324
        %494 = vmatprep.subr.mxu0 0.0
        %495 = vmatpush1.msra.mxu0 %v323
        %496 = vmatprep.subr.mxu0 0.0
        %497 = vmatpush1.msra.mxu0 %v322
        %498 = vmatprep.subr.mxu0 0.0
        %499 = vmatpush1.msra.mxu0 %v321
        %500 = vmatprep.subr.mxu0 0.0
        %501 = vmatpush2.msra.mxu0 0.0
        %502 = vmatprep.subr.mxu0 0.0
        %503 = vmatpush2.msra.mxu0 0.0
        %504 = vmatprep.subr.mxu0 0.0
        %505 = vmatpush2.msra.mxu0 0.0
        %506 = vmatprep.subr.mxu0 0.0
        %507 = vmatpush2.msra.mxu0 0.0
        %508 = vmatprep.subr.mxu0 0.0
        %509 = vmatpush2.msra.mxu0 0.0
        %510 = vmatprep.subr.mxu0 0.0
        %511 = vmatpush2.msra.mxu0 0.0
        %512 = vmatprep.subr.mxu0 0.0
        %513 = vmatpush2.msra.mxu0 0.0
        %514 = vmatprep.subr.mxu0 0.0
        %515 = vmatpush2.msra.mxu0 0.0
        %516 = vmatprep.subr.mxu0 0.0
        %517 = vmatpush2.msra.mxu0 0.0
        %518 = vmatprep.subr.mxu0 0.0
        %519 = vmatpush2.msra.mxu0 0.0
        %520 = vmatprep.subr.mxu0 0.0
        %521 = vmatpush2.msra.mxu0 0.0
        %522 = vmatprep.subr.mxu0 0.0
        %523 = vmatpush2.msra.mxu0 0.0
        %524 = vmatprep.subr.mxu0 0.0
        %525 = vmatpush2.msra.mxu0 0.0
        %526 = vmatprep.subr.mxu0 0.0
        %527 = vmatpush2.msra.mxu0 0.0
        %528 = vmatprep.subr.mxu0 0.0
        %529 = vmatpush2.msra.mxu0 0.0
        %530 = vmatprep.subr.mxu0 0.0
        %531 = vmatpush2.msra.mxu0 0.0
        %532 = vmatprep.mubr.f32.mxu0 0.0
        %533 = vmatmul.mubr.f32.gmra.mxu0 %v466
        %v534 = vpop.f32.mrf.mxu0
        %v535 = vadd.f32 0.0, %v534
        %v536 = vpop.f32.mrf.mxu0
        %537 = vdwg.mxu0
        %v538 = vadd.f32 %v462, %v535
        %v539 = vadd.f32 %v538, 1.0
        %v540 = vxor.u32 %v539, 2147483648
        %v541 = vmul.f32 %v540, 1.442695
        %v542 = vpow.pop %v541
        %v543 = vadd.f32 %v542, 1.0
        %v544 = vrcp.pop %v543
        %v545 = vmul.f32 1.0, %v544
        %v546 = vmul.f32 %v545, %v460
        %v547 = vxor.u32 %v538, 2147483648
        %v548 = vmul.f32 %v547, 1.442695
        %v549 = vpow.pop %v548
        %v550 = vadd.f32 %v549, 1.0
        %v551 = vrcp.pop %v550
        %v552 = vmul.f32 1.0, %v551
        %v553 = vtanh.pop %v538
        %555 = vrot.lane.b32.xlu0 %v553, 96
        %v556 = vpop.permute.xlu0 %555
        %v558 = vmul.f32 %v552, %v556
        %560 = vrot.lane.b32.xlu0 %v558, 64
        %v561 = vpop.permute.xlu0 %560
        %v563 = vadd.f32 %v546, %v561
        %v564 = vtanh.pop %v563
        %566 = vrot.lane.b32.xlu0 %v564, 32
        %v567 = vpop.permute.xlu0 %566
        %v569 = vmul.f32 %v552, %v567
        %571 = vrot.lane.b32.xlu0 %v569, 32
        %v572 = vpop.permute.xlu0 %571
        %s574 = scalar_lea.vmem %s280, 2 [#allocation11]
        %575 = vst.msk [vmem:[%s574] sm:$0x3] %vm450, %v572
        %s576 = scalar_lea.vmem %s295, 4
        %v577 = vld [vmem:[%s576] sm:$0x3]
        %579 = vset.pattern.permute.xlu0 0
        %580 = vperm.xlu0 %579, %v577
        %v581 = vpop.permute.xlu0 %580
        %v583 = vmul.f32 %v569, %v581
        %v584 = vmul.f32 %v563, %v581
        %s585 = scalar_lea.vmem %s289, 4
        %v586 = vld [vmem:[%s585] sm:$0x3]
        %588 = vrot.lane.b32.xlu0 %v583, 32
        %v589 = vpop.permute.xlu0 %588
        %v590 = vsel %vm336, %v589, 0
        %592 = vmatprep.subr.mxu0 0.0
        %593 = vmatpush1.msra.mxu0 0.0
        %594 = vmatprep.subr.mxu0 0.0
        %595 = vmatpush1.msra.mxu0 0.0
        %596 = vmatprep.subr.mxu0 0.0
        %597 = vmatpush1.msra.mxu0 0.0
        %598 = vmatprep.subr.mxu0 0.0
        %599 = vmatpush1.msra.mxu0 0.0
        %600 = vmatprep.subr.mxu0 0.0
        %601 = vmatpush1.msra.mxu0 0.0
        %602 = vmatprep.subr.mxu0 0.0
        %603 = vmatpush1.msra.mxu0 0.0
        %604 = vmatprep.subr.mxu0 0.0
        %605 = vmatpush1.msra.mxu0 0.0
        %606 = vmatprep.subr.mxu0 0.0
        %607 = vmatpush1.msra.mxu0 0.0
        %608 = vmatprep.subr.mxu0 0.0
        %609 = vmatpush1.msra.mxu0 0.0
        %610 = vmatprep.subr.mxu0 0.0
        %611 = vmatpush1.msra.mxu0 0.0
        %612 = vmatprep.subr.mxu0 0.0
        %613 = vmatpush1.msra.mxu0 0.0
        %614 = vmatprep.subr.mxu0 0.0
        %615 = vmatpush1.msra.mxu0 0.0
        %616 = vmatprep.subr.mxu0 0.0
        %617 = vmatpush1.msra.mxu0 %v324
        %618 = vmatprep.subr.mxu0 0.0
        %619 = vmatpush1.msra.mxu0 %v323
        %620 = vmatprep.subr.mxu0 0.0
        %621 = vmatpush1.msra.mxu0 %v322
        %622 = vmatprep.subr.mxu0 0.0
        %623 = vmatpush1.msra.mxu0 %v321
        %624 = vmatprep.subr.mxu0 0.0
        %625 = vmatpush2.msra.mxu0 0.0
        %626 = vmatprep.subr.mxu0 0.0
        %627 = vmatpush2.msra.mxu0 0.0
        %628 = vmatprep.subr.mxu0 0.0
        %629 = vmatpush2.msra.mxu0 0.0
        %630 = vmatprep.subr.mxu0 0.0
        %631 = vmatpush2.msra.mxu0 0.0
        %632 = vmatprep.subr.mxu0 0.0
        %633 = vmatpush2.msra.mxu0 0.0
        %634 = vmatprep.subr.mxu0 0.0
        %635 = vmatpush2.msra.mxu0 0.0
        %636 = vmatprep.subr.mxu0 0.0
        %637 = vmatpush2.msra.mxu0 0.0
        %638 = vmatprep.subr.mxu0 0.0
        %639 = vmatpush2.msra.mxu0 0.0
        %640 = vmatprep.subr.mxu0 0.0
        %641 = vmatpush2.msra.mxu0 0.0
        %642 = vmatprep.subr.mxu0 0.0
        %643 = vmatpush2.msra.mxu0 0.0
        %644 = vmatprep.subr.mxu0 0.0
        %645 = vmatpush2.msra.mxu0 0.0
        %646 = vmatprep.subr.mxu0 0.0
        %647 = vmatpush2.msra.mxu0 0.0
        %648 = vmatprep.subr.mxu0 0.0
        %649 = vmatpush2.msra.mxu0 0.0
        %650 = vmatprep.subr.mxu0 0.0
        %651 = vmatpush2.msra.mxu0 0.0
        %652 = vmatprep.subr.mxu0 0.0
        %653 = vmatpush2.msra.mxu0 0.0
        %654 = vmatprep.subr.mxu0 0.0
        %655 = vmatpush2.msra.mxu0 0.0
        %656 = vmatprep.mubr.f32.mxu0 0.0
        %657 = vmatmul.mubr.f32.gmra.mxu0 %v590
        %v658 = vpop.f32.mrf.mxu0
        %v659 = vadd.f32 0.0, %v658
        %v660 = vpop.f32.mrf.mxu0
        %661 = vdwg.mxu0
        %v662 = vadd.f32 %v586, %v659
        %v663 = vadd.f32 %v662, 1.0
        %v664 = vxor.u32 %v663, 2147483648
        %v665 = vmul.f32 %v664, 1.442695
        %v666 = vpow.pop %v665
        %v667 = vadd.f32 %v666, 1.0
        %v668 = vrcp.pop %v667
        %v669 = vmul.f32 1.0, %v668
        %v670 = vmul.f32 %v669, %v584
        %v671 = vxor.u32 %v662, 2147483648
        %v672 = vmul.f32 %v671, 1.442695
        %v673 = vpow.pop %v672
        %v674 = vadd.f32 %v673, 1.0
        %v675 = vrcp.pop %v674
        %v676 = vmul.f32 1.0, %v675
        %v677 = vtanh.pop %v662
        %679 = vrot.lane.b32.xlu0 %v677, 96
        %v680 = vpop.permute.xlu0 %679
        %v682 = vmul.f32 %v676, %v680
        %684 = vrot.lane.b32.xlu0 %v682, 64
        %v685 = vpop.permute.xlu0 %684
        %v687 = vadd.f32 %v670, %v685
        %v688 = vtanh.pop %v687
        %690 = vrot.lane.b32.xlu0 %v688, 32
        %v691 = vpop.permute.xlu0 %690
        %v693 = vmul.f32 %v676, %v691
        %695 = vrot.lane.b32.xlu0 %v693, 32
        %v696 = vpop.permute.xlu0 %695
        %s698 = scalar_lea.vmem %s280, 4 [#allocation11]
        %699 = vst.msk [vmem:[%s698] sm:$0x3] %vm450, %v696
        %s700 = scalar_lea.vmem %s295, 6
        %v701 = vld [vmem:[%s700] sm:$0x3]
        %703 = vset.pattern.permute.xlu0 0
        %704 = vperm.xlu0 %703, %v701
        %v705 = vpop.permute.xlu0 %704
        %v707 = vmul.f32 %v693, %v705
        %v708 = vmul.f32 %v687, %v705
        %s709 = scalar_lea.vmem %s289, 6
        %v710 = vld [vmem:[%s709] sm:$0x3]
        %712 = vrot.lane.b32.xlu0 %v707, 32
        %v713 = vpop.permute.xlu0 %712
        %v714 = vsel %vm336, %v713, 0
        %716 = vmatprep.subr.mxu0 0.0
        %717 = vmatpush1.msra.mxu0 0.0
        %718 = vmatprep.subr.mxu0 0.0
        %719 = vmatpush1.msra.mxu0 0.0
        %720 = vmatprep.subr.mxu0 0.0
        %721 = vmatpush1.msra.mxu0 0.0
        %722 = vmatprep.subr.mxu0 0.0
        %723 = vmatpush1.msra.mxu0 0.0
        %724 = vmatprep.subr.mxu0 0.0
        %725 = vmatpush1.msra.mxu0 0.0
        %726 = vmatprep.subr.mxu0 0.0
        %727 = vmatpush1.msra.mxu0 0.0
        %728 = vmatprep.subr.mxu0 0.0
        %729 = vmatpush1.msra.mxu0 0.0
        %730 = vmatprep.subr.mxu0 0.0
        %731 = vmatpush1.msra.mxu0 0.0
        %732 = vmatprep.subr.mxu0 0.0
        %733 = vmatpush1.msra.mxu0 0.0
        %734 = vmatprep.subr.mxu0 0.0
        %735 = vmatpush1.msra.mxu0 0.0
        %736 = vmatprep.subr.mxu0 0.0
        %737 = vmatpush1.msra.mxu0 0.0
        %738 = vmatprep.subr.mxu0 0.0
        %739 = vmatpush1.msra.mxu0 0.0
        %740 = vmatprep.subr.mxu0 0.0
        %741 = vmatpush1.msra.mxu0 %v324
        %742 = vmatprep.subr.mxu0 0.0
        %743 = vmatpush1.msra.mxu0 %v323
        %744 = vmatprep.subr.mxu0 0.0
        %745 = vmatpush1.msra.mxu0 %v322
        %746 = vmatprep.subr.mxu0 0.0
        %747 = vmatpush1.msra.mxu0 %v321
        %748 = vmatprep.subr.mxu0 0.0
        %749 = vmatpush2.msra.mxu0 0.0
        %750 = vmatprep.subr.mxu0 0.0
        %751 = vmatpush2.msra.mxu0 0.0
        %752 = vmatprep.subr.mxu0 0.0
        %753 = vmatpush2.msra.mxu0 0.0
        %754 = vmatprep.subr.mxu0 0.0
        %755 = vmatpush2.msra.mxu0 0.0
        %756 = vmatprep.subr.mxu0 0.0
        %757 = vmatpush2.msra.mxu0 0.0
        %758 = vmatprep.subr.mxu0 0.0
        %759 = vmatpush2.msra.mxu0 0.0
        %760 = vmatprep.subr.mxu0 0.0
        %761 = vmatpush2.msra.mxu0 0.0
        %762 = vmatprep.subr.mxu0 0.0
        %763 = vmatpush2.msra.mxu0 0.0
        %764 = vmatprep.subr.mxu0 0.0
        %765 = vmatpush2.msra.mxu0 0.0
        %766 = vmatprep.subr.mxu0 0.0
        %767 = vmatpush2.msra.mxu0 0.0
        %768 = vmatprep.subr.mxu0 0.0
        %769 = vmatpush2.msra.mxu0 0.0
        %770 = vmatprep.subr.mxu0 0.0
        %771 = vmatpush2.msra.mxu0 0.0
        %772 = vmatprep.subr.mxu0 0.0
        %773 = vmatpush2.msra.mxu0 0.0
        %774 = vmatprep.subr.mxu0 0.0
        %775 = vmatpush2.msra.mxu0 0.0
        %776 = vmatprep.subr.mxu0 0.0
        %777 = vmatpush2.msra.mxu0 0.0
        %778 = vmatprep.subr.mxu0 0.0
        %779 = vmatpush2.msra.mxu0 0.0
        %780 = vmatprep.mubr.f32.mxu0 0.0
        %781 = vmatmul.mubr.f32.gmra.mxu0 %v714
        %v782 = vpop.f32.mrf.mxu0
        %v783 = vadd.f32 0.0, %v782
        %v784 = vpop.f32.mrf.mxu0
        %785 = vdwg.mxu0
        %v786 = vadd.f32 %v710, %v783
        %v787 = vadd.f32 %v786, 1.0
        %v788 = vxor.u32 %v787, 2147483648
        %v789 = vmul.f32 %v788, 1.442695
        %v790 = vpow.pop %v789
        %v791 = vadd.f32 %v790, 1.0
        %v792 = vrcp.pop %v791
        %v793 = vmul.f32 1.0, %v792
        %v794 = vmul.f32 %v793, %v708
        %v795 = vxor.u32 %v786, 2147483648
        %v796 = vmul.f32 %v795, 1.442695
        %v797 = vpow.pop %v796
        %v798 = vadd.f32 %v797, 1.0
        %v799 = vrcp.pop %v798
        %v800 = vmul.f32 1.0, %v799
        %v801 = vtanh.pop %v786
        %803 = vrot.lane.b32.xlu0 %v801, 96
        %v804 = vpop.permute.xlu0 %803
        %v806 = vmul.f32 %v800, %v804
        %808 = vrot.lane.b32.xlu0 %v806, 64
        %v809 = vpop.permute.xlu0 %808
        %v811 = vadd.f32 %v794, %v809
        %v812 = vtanh.pop %v811
        %814 = vrot.lane.b32.xlu0 %v812, 32
        %v815 = vpop.permute.xlu0 %814
        %v817 = vmul.f32 %v800, %v815
        %819 = vrot.lane.b32.xlu0 %v817, 32
        %v820 = vpop.permute.xlu0 %819
        %s822 = scalar_lea.vmem %s280, 6 [#allocation11]
        %823 = vst.msk [vmem:[%s822] sm:$0x3] %vm450, %v820
        %824 = vst.msk [vmem:[#allocation3] sm:$0x3] %vm450, %v820
        %826 = vrot.lane.b32.xlu0 %v811, 64
        %v827 = vpop.permute.xlu0 %826
        %829 = vst.msk [vmem:[#allocation4] sm:$0x3] %vm450, %v827
        %p830 = scmp.eq.s32.totalorder %s25, 1
        // Predicated region
        $region53: #{tpu_custom_call.1} parent=35 // pred_check
          %p831 = pneg %p830
        $region54: #{tpu_custom_call.1} parent=35 // pred_check_branch
          %833 = sbr.rel (%p831) target = $region56
        $region55: #{tpu_custom_call.1} parent=35 // pred_region
          %834 = vst.msk [vmem:[#allocation12] sm:$0x3] %vm450, %v820
          %835 = vst.msk [vmem:[#allocation14] sm:$0x3] %vm450, %v827
        $region56: #{tpu_custom_call.1} parent=35 // pred_fallthru
          _
        %s836 = sand.u32 %s127, 1
        %s837 = scalar_lea.sflag [#allocation8], %s836
        %s838 = sand.u32 %s127, 1
        %s839 = smul.addr %s838, 8
        %s840 = scalar_lea.vmem [#allocation11], %s839
        // Predicated region
        $region57: #{tpu_custom_call.1} parent=35 // pred_check
          %p841 = pneg %p137
        $region58: #{tpu_custom_call.1} parent=35 // pred_check_branch
          %843 = sbr.rel (%p841) target = $region60
        $region59: #{tpu_custom_call.1} parent=35 // pred_region
          %s844 = smul.u32 4, %s25
          %s846 = ssub.s32 128, 128
          %847 = vsyncadd %s837, %s846
          %s848 = smul.addr %s844, 32
          %s849 = scalar_lea.hbm %s5, %s848
          %s850 = sshll.u32 %s840, 4
          %s851 = int_to_ptr.vmem [resolvable:$true] %s850
          %856 = dma.vmem_to_hbm [thread:$0]  %s851, 128, %s849, %s837, 32, 32, 2
        $region60: #{tpu_custom_call.1} parent=35 // pred_fallthru
          _
        // Predicated region
        $region61: #{tpu_custom_call.1} parent=35 // pred_check
          %p857 = pneg %p158
        $region62: #{tpu_custom_call.1} parent=35 // pred_check_branch
          %859 = sbr.rel (%p857) target = $region64
        $region63: #{tpu_custom_call.1} parent=35 // pred_region
          %s861 = ssub.s32 32, 32
          %862 = vsyncadd [#allocation13], %s861
          %s864 = sshll.u32 [#allocation12], 4
          %s865 = int_to_ptr.vmem [resolvable:$true] %s864
          %867 = dma.vmem_to_hbm [thread:$0]  %s865, 32, %s6, [#allocation13]
        $region64: #{tpu_custom_call.1} parent=35 // pred_fallthru
          _
        // Predicated region
        $region65: #{tpu_custom_call.1} parent=35 // pred_check
          %p868 = pneg %p179
        $region66: #{tpu_custom_call.1} parent=35 // pred_check_branch
          %870 = sbr.rel (%p868) target = $region68
        $region67: #{tpu_custom_call.1} parent=35 // pred_region
          %s872 = ssub.s32 32, 32
          %873 = vsyncadd [#allocation13], %s872
          %s875 = sshll.u32 [#allocation14], 4
          %s876 = int_to_ptr.vmem [resolvable:$true] %s875
          %878 = dma.vmem_to_hbm [thread:$0]  %s876, 32, %s7, [#allocation13]
        $region68: #{tpu_custom_call.1} parent=35 // pred_fallthru
          _
        // Predicated region
        $region69: #{tpu_custom_call.1} parent=35 // pred_check
          %p879 = pneg %p158
        $region70: #{tpu_custom_call.1} parent=35 // pred_check_branch
          %881 = sbr.rel (%p879) target = $region72
        $region71: #{tpu_custom_call.1} parent=35 // pred_region
          %882 = dma.done [#allocation13], 32
        $region72: #{tpu_custom_call.1} parent=35 // pred_fallthru
          _
        // Predicated region
        $region73: #{tpu_custom_call.1} parent=35 // pred_check
          %p883 = pneg %p179
        $region74: #{tpu_custom_call.1} parent=35 // pred_check_branch
          %885 = sbr.rel (%p883) target = $region76
        $region75: #{tpu_custom_call.1} parent=35 // pred_region
          %886 = dma.done [#allocation13], 32
        $region76: #{tpu_custom_call.1} parent=35 // pred_fallthru
          _
      $region36: #{tpu_custom_call.1} parent=5 // pred_fallthru
        _
      %p887 = scmp.le.s32.totalorder 2, %s20
      // Predicated region
      $region77: #{tpu_custom_call.1} parent=5 // pred_check
        %p888 = pneg %p887
      $region78: #{tpu_custom_call.1} parent=5 // pred_check_branch
        %890 = sbr.rel (%p888) target = $region80
      $region79: #{tpu_custom_call.1} parent=5 // pred_region
        %s891 = ssub.s32 %s20, 2
        // Predicated region
        $region81: #{tpu_custom_call.1} parent=79 // pred_check
          %p892 = pneg %p143
        $region82: #{tpu_custom_call.1} parent=79 // pred_check_branch
          %894 = sbr.rel (%p892) target = $region84
        $region83: #{tpu_custom_call.1} parent=79 // pred_region
          %s895 = sand.u32 %s128, 1
          %s896 = scalar_lea.sflag [#allocation8], %s895
          %s897 = sand.u32 %s128, 1
          %s898 = smul.addr %s897, 8
          %s899 = scalar_lea.vmem [#allocation11], %s898
          %900 = dma.done %s896, 128
        $region84: #{tpu_custom_call.1} parent=79 // pred_fallthru
          _
      $region80: #{tpu_custom_call.1} parent=5 // pred_fallthru
        _
    $region6: #{tpu_custom_call.1} parent=1 // loop_footer
      %s24 = sadd.s32 1, %s20
    $region7: #{tpu_custom_call.1} parent=1 // loop_footer_branch
      %19 = sbr.rel target = $region3
    $region8: #{tpu_custom_call.1} parent=1 // loop_exit
      _
    %901 = vsyncpa [#allocation7], 1
    %s902 = scalar_lea.sflag [#allocation7], 1
    %903 = vsyncpa %s902, 1
    %904 = vsyncpa [#allocation10], 1
    %905 = vsyncpa [#allocation8], 1
    %s906 = scalar_lea.sflag [#allocation8], 1
    %907 = vsyncpa %s906, 1
    %908 = vsyncpa [#allocation13], 1
  %909 = vsyncmov [#allocation5]
  %s910 = vpop.sfrf %909
  %p911 = scmp.eq.s32.totalorder %s910, 0
  %p912 = pneg %p911
  %914 = shalt.err (%p912)

</llo_original>
